<compile_context>
chip_gen: v7x
topology: tpu7x:2x2x1
jax: 0.10.0
libtpu: 0.0.40
codegen_flags: <defaults>
</compile_context>

<pallas_src>
import jax
import jax.numpy as jnp
from jax import lax
from jax.experimental import pallas as pl
from jax.experimental.pallas import tpu as pltpu

LN_EPS = 1e-5
_LANE = 128


def _round_up(x, m):
    return ((x + m - 1) // m) * m


def _vmem_capacity_bytes():
    # One-time, trace-time hardware query (not in the hot path). Falls back to the
    # most conservative capacity (v7x, 64 MiB) if the query is unavailable.
    try:
        return int(pltpu.get_tpu_info().vmem_capacity_bytes)
    except Exception:
        return 64 << 20


def _ln_relu(x, gamma, beta):
    # LayerNorm over last dim (biased variance, like torch), then affine + ReLU.
    mu = jnp.mean(x, axis=-1, keepdims=True)
    xc = x - mu
    var = jnp.mean(xc * xc, axis=-1, keepdims=True)
    y = xc * lax.rsqrt(var + LN_EPS)
    return jnp.maximum(y * gamma + beta, 0.0)


def feature_head_kernel(v_ref, m_ref, wv_ref, wm_ref, wfv_ref, wfm_ref, p_ref,
                        out_ref):
    # Packed param slab rows: 0 bv, 1 gv, 2 bev, 3 bm, 4 gm, 5 bem, 6 bf, 7 gf, 8 bef.
    p = p_ref[...]
    bv, gv, bev = p[0:1], p[1:2], p[2:3]
    bm, gm, bem = p[3:4], p[4:5], p[5:6]
    bf, gf, bef = p[6:7], p[7:8], p[8:9]

    # visual branch: Linear + LayerNorm + ReLU  (Dropout is identity in eval).
    # Inputs already arrive in the MXU compute dtype (bf16) -> no in-kernel cast.
    v = jnp.dot(v_ref[...], wv_ref[...], preferred_element_type=jnp.float32)
    v = _ln_relu(v + bv, gv, bev)

    # motion branch: Linear + LayerNorm + ReLU
    m = jnp.dot(m_ref[...], wm_ref[...], preferred_element_type=jnp.float32)
    m = _ln_relu(m + bm, gm, bem)

    # fusion: concat(v, m) @ Wf == v @ Wf_top + m @ Wf_bot
    cdt = wfv_ref.dtype
    f = (jnp.dot(v.astype(cdt), wfv_ref[...], preferred_element_type=jnp.float32)
         + jnp.dot(m.astype(cdt), wfm_ref[...], preferred_element_type=jnp.float32)
         + bf)
    out_ref[...] = _ln_relu(f, gf, bef).astype(out_ref.dtype)


def _build_call(N, Dv_p, Dm_p, d, tile_m, in_itemsize, w_itemsize, out_dtype):
    """Constructs the pallas_call for the fused feature head."""
    grid = pl.cdiv(N, tile_m)
    out_itemsize = jnp.dtype(out_dtype).itemsize

    def const2d(shape):
        # Constant-index blocks (weights / param slab): no re-fetch across grid steps.
        return pl.BlockSpec(shape, lambda i: (0, 0))

    def row_spec(dd):
        return pl.BlockSpec((tile_m, dd), lambda i: (i, 0))

    # VMEM budget: (double-buffered) weights + param slab + double-buffered row
    # tiles in/out + f32 intermediates, plus headroom. Capped per chip generation
    # with headroom for compiler-internal scratch.
    w_bytes = (Dv_p * d + Dm_p * d + 2 * d * d) * w_itemsize
    slab_bytes = 16 * d * 4
    tile_in = tile_m * (Dv_p + Dm_p) * in_itemsize
    tile_out = tile_m * d * out_itemsize
    interm = 3 * tile_m * d * 4
    footprint = 2 * (w_bytes + slab_bytes + tile_in + tile_out) + interm
    cap = int(_vmem_capacity_bytes() * 0.85)
    vmem_limit = int(min(footprint + (8 << 20), cap))

    flops = 2 * N * (Dv_p * d + Dm_p * d + 2 * d * d)
    bytes_accessed = (N * (Dv_p + Dm_p) * in_itemsize
                      + w_bytes + slab_bytes + N * d * out_itemsize)

    return pl.pallas_call(
        feature_head_kernel,
        out_shape=jax.ShapeDtypeStruct((N, d), out_dtype),
        grid_spec=pltpu.PrefetchScalarGridSpec(
            num_scalar_prefetch=0,
            grid=(grid,),
            in_specs=[
                row_spec(Dv_p),          # visual rows (bf16)
                row_spec(Dm_p),          # motion rows (bf16)
                const2d((Dv_p, d)),      # Wv (bf16)
                const2d((Dm_p, d)),      # Wm (bf16)
                const2d((d, d)),         # Wf top half (acts on visual)
                const2d((d, d)),         # Wf bottom half (acts on motion)
                const2d((16, d)),        # packed biases / LN params (f32)
            ],
            out_specs=pl.BlockSpec((tile_m, d), lambda i: (i, 0)),
        ),
        compiler_params=pltpu.CompilerParams(
            dimension_semantics=("parallel",),
            vmem_limit_bytes=vmem_limit,
        ),
        cost_estimate=pl.CostEstimate(
            flops=flops, transcendentals=3 * N, bytes_accessed=bytes_accessed),
    )


def feature_head_forward(visual, motion, params, *, tile_m=512,
                         compute_dtype=jnp.bfloat16, out_dtype=jnp.bfloat16):
    """visual: (B, T, Dv), motion: (B, T, Dm) -> (B, T, d_model)."""
    B, T, Dv = visual.shape
    _, _, Dm = motion.shape
    d = params["bv"].shape[-1]
    assert d % _LANE == 0, "d_model must be a multiple of 128 for lane-dense LN/stores"
    # TODO(synk): non-multiple-of-128 d_model would need a masked LayerNorm inside the
    # kernel; real configs (d_model=512/1024) are already lane-dense.

    N = B * T
    v2 = visual.reshape(N, Dv).astype(compute_dtype)
    m2 = motion.reshape(N, Dm).astype(compute_dtype)

    # Pad contraction dims to 128 lanes (exact: zero cols in x, zero rows in W).
    # No-op for the real feature sizes (2048 / 1024 / 1408 are already 128-dense).
    Dv_p = _round_up(Dv, _LANE)
    Dm_p = _round_up(Dm, _LANE)
    if Dv_p != Dv:
        v2 = jnp.pad(v2, ((0, 0), (0, Dv_p - Dv)))
    if Dm_p != Dm:
        m2 = jnp.pad(m2, ((0, 0), (0, Dm_p - Dm)))

    Wv = jnp.pad(params["Wv"], ((0, Dv_p - Dv), (0, 0))).astype(compute_dtype)
    Wm = jnp.pad(params["Wm"], ((0, Dm_p - Dm), (0, 0))).astype(compute_dtype)
    Wfv = params["Wf_v"].astype(compute_dtype)
    Wfm = params["Wf_m"].astype(compute_dtype)

    # Pack the nine (1, d) bias/gamma/beta params into one (16, d) slab (single DMA).
    rows = jnp.concatenate(
        [params[k] for k in ("bv", "gv", "bev", "bm", "gm", "bem", "bf", "gf", "bef")],
        axis=0).astype(jnp.float32)
    slab = jnp.zeros((16, d), jnp.float32).at[:9].set(rows)

    # Row tiling: no padding of N. tile_m is a multiple of 8 (sublane); if N fits in
    # one tile, use a single full-extent block. Otherwise the last grid block is a
    # partial boundary block (row-wise LN -> OOB rows are harmless, writes masked).
    tile_m = max(8, (int(tile_m) // 8) * 8)
    if N <= tile_m:
        tile_m = N
    # TODO(synk): on v7x (2 TensorCores) an even grid-step count would balance the
    # 'parallel' axis better; left untouched to keep the wrapper generation-agnostic.

    call = _build_call(N, Dv_p, Dm_p, d, tile_m,
                       jnp.dtype(compute_dtype).itemsize,
                       jnp.dtype(compute_dtype).itemsize,
                       out_dtype)
    out = call(v2, m2, Wv, Wm, Wfv, Wfm, slab)
    return out.reshape(B, T, d)


def reference_forward(visual, motion, params):
    def ln_relu(x, g, b):
        mu = jnp.mean(x, axis=-1, keepdims=True)
        var = jnp.mean((x - mu) ** 2, axis=-1, keepdims=True)
        return jnp.maximum((x - mu) / jnp.sqrt(var + LN_EPS) * g + b, 0.0)

    v = ln_relu(visual @ params["Wv"] + params["bv"], params["gv"], params["bev"])
    m = ln_relu(motion @ params["Wm"] + params["bm"], params["gm"], params["bem"])
    f = jnp.concatenate([v, m], axis=-1)
    Wf = jnp.concatenate([params["Wf_v"], params["Wf_m"]], axis=0)
    return ln_relu(f @ Wf + params["bf"], params["gf"], params["bef"])


def make_params(key, visual_size, motion_size, d_model):
    ks = jax.random.split(key, 6)
    sc_v = 1.0 / jnp.sqrt(visual_size)
    sc_m = 1.0 / jnp.sqrt(motion_size)
    sc_f = 1.0 / jnp.sqrt(2 * d_model)
    return {
        "Wv": jax.random.normal(ks[0], (visual_size, d_model), jnp.float32) * sc_v,
        "bv": jax.random.normal(ks[1], (1, d_model), jnp.float32) * 0.01,
        "gv": jnp.ones((1, d_model), jnp.float32),
        "bev": jnp.zeros((1, d_model), jnp.float32),
        "Wm": jax.random.normal(ks[2], (motion_size, d_model), jnp.float32) * sc_m,
        "bm": jax.random.normal(ks[3], (1, d_model), jnp.float32) * 0.01,
        "gm": jnp.ones((1, d_model), jnp.float32),
        "bem": jnp.zeros((1, d_model), jnp.float32),
        "Wf_v": jax.random.normal(ks[4], (d_model, d_model), jnp.float32) * sc_f,
        "Wf_m": jax.random.normal(ks[5], (d_model, d_model), jnp.float32) * sc_f,
        "bf": jnp.zeros((1, d_model), jnp.float32),
        "gf": jnp.ones((1, d_model), jnp.float32),
        "bef": jnp.zeros((1, d_model), jnp.float32),
    }


if __name__ == "__main__":
    # Small synthetic shapes consistent with the module's forward:
    # (B, T, visual_size) / (B, T, motion_size) -> (B, T, d_model)
    # Real sizes are 2048/1024 features and d_model=512; scaled-down but lane-dense.
    B, T = 2, 8
    visual_size, motion_size, d_model = 256, 256, 128

    key = jax.random.PRNGKey(0)
    k_v, k_m, k_p = jax.random.split(key, 3)
    visual = jax.random.normal(k_v, (B, T, visual_size), jnp.float32)
    motion = jax.random.normal(k_m, (B, T, motion_size), jnp.float32)
    params = make_params(k_p, visual_size, motion_size, d_model)

    # TODO(synk): Dropout(p=0.2) layers are treated as identity (eval mode).
    out = feature_head_forward(visual, motion, params, tile_m=512)
    out = jax.block_until_ready(out)

    ref = reference_forward(visual, motion, params)
    assert out.shape == (B, T, d_model)
    # bf16 activations/matmuls (f32 accumulation) and bf16 output vs f32 reference
    # -> loosened tolerance.
    assert jnp.allclose(out.astype(jnp.float32), ref, atol=1e-1, rtol=1e-1)
    print("KERNEL_OK")
</pallas_src>

<mosaic_0001>
module attributes {stable_mosaic.version = 11 : i64} {
  func.func @feature_head_kernel(%arg0: i32, %arg1: memref<16x256xbf16, #tpu.memory_space<vmem>>, %arg2: memref<16x256xbf16, #tpu.memory_space<vmem>>, %arg3: memref<256x128xbf16, #tpu.memory_space<vmem>>, %arg4: memref<256x128xbf16, #tpu.memory_space<vmem>>, %arg5: memref<128x128xbf16, #tpu.memory_space<vmem>>, %arg6: memref<128x128xbf16, #tpu.memory_space<vmem>>, %arg7: memref<16x128xf32, #tpu.memory_space<vmem>>, %arg8: memref<16x128xbf16, #tpu.memory_space<vmem>>) attributes {dimension_semantics = [#tpu.dimension_semantics<parallel>], iteration_bounds = array<i64: 1>, scalar_prefetch = 0 : i64, scratch_operands = 0 : i64, tpu.core_type = #tpu.core_type<tc>, window_params = [{transform_indices = @transform_0, window_bounds = array<i64: 16, 256>}, {transform_indices = @transform_1, window_bounds = array<i64: 16, 256>}, {pipeline_mode = #tpu.pipeline_mode<synchronous>, transform_indices = @transform_2, window_bounds = array<i64: 256, 128>}, {pipeline_mode = #tpu.pipeline_mode<synchronous>, transform_indices = @transform_3, window_bounds = array<i64: 256, 128>}, {pipeline_mode = #tpu.pipeline_mode<synchronous>, transform_indices = @transform_4, window_bounds = array<i64: 128, 128>}, {pipeline_mode = #tpu.pipeline_mode<synchronous>, transform_indices = @transform_5, window_bounds = array<i64: 128, 128>}, {pipeline_mode = #tpu.pipeline_mode<synchronous>, transform_indices = @transform_6, window_bounds = array<i64: 16, 128>}, {transform_indices = @transform_7, window_bounds = array<i64: 16, 128>}]} {
    %c0 = arith.constant 0 : index
    %c0_0 = arith.constant 0 : index
    %0 = vector.load %arg7[%c0, %c0_0] : memref<16x128xf32, #tpu.memory_space<vmem>>, vector<16x128xf32>
    %1 = vector.extract_strided_slice %0 {offsets = [0, 0], sizes = [1, 128], strides = [1, 1]} : vector<16x128xf32> to vector<1x128xf32>
    %2 = vector.extract_strided_slice %0 {offsets = [1, 0], sizes = [1, 128], strides = [1, 1]} : vector<16x128xf32> to vector<1x128xf32>
    %3 = vector.extract_strided_slice %0 {offsets = [2, 0], sizes = [1, 128], strides = [1, 1]} : vector<16x128xf32> to vector<1x128xf32>
    %4 = vector.extract_strided_slice %0 {offsets = [3, 0], sizes = [1, 128], strides = [1, 1]} : vector<16x128xf32> to vector<1x128xf32>
    %5 = vector.extract_strided_slice %0 {offsets = [4, 0], sizes = [1, 128], strides = [1, 1]} : vector<16x128xf32> to vector<1x128xf32>
    %6 = vector.extract_strided_slice %0 {offsets = [5, 0], sizes = [1, 128], strides = [1, 1]} : vector<16x128xf32> to vector<1x128xf32>
    %7 = vector.extract_strided_slice %0 {offsets = [6, 0], sizes = [1, 128], strides = [1, 1]} : vector<16x128xf32> to vector<1x128xf32>
    %8 = vector.extract_strided_slice %0 {offsets = [7, 0], sizes = [1, 128], strides = [1, 1]} : vector<16x128xf32> to vector<1x128xf32>
    %9 = vector.extract_strided_slice %0 {offsets = [8, 0], sizes = [1, 128], strides = [1, 1]} : vector<16x128xf32> to vector<1x128xf32>
    %c0_1 = arith.constant 0 : index
    %c0_2 = arith.constant 0 : index
    %10 = vector.load %arg1[%c0_1, %c0_2] : memref<16x256xbf16, #tpu.memory_space<vmem>>, vector<16x256xbf16>
    %c0_3 = arith.constant 0 : index
    %c0_4 = arith.constant 0 : index
    %11 = vector.load %arg3[%c0_3, %c0_4] : memref<256x128xbf16, #tpu.memory_space<vmem>>, vector<256x128xbf16>
    %cst = arith.constant dense<0.000000e+00> : vector<16x128xf32>
    %12 = tpu.matmul %10, %11, %cst {dimension_numbers = #tpu.dot_dimension_numbers<[1], [0], [0], [1], [0, 0, 1, 1], [], []>} : vector<16x256xbf16>, vector<256x128xbf16>, vector<16x128xf32> -> vector<16x128xf32>
    %13 = vector.broadcast %1 : vector<1x128xf32> to vector<16x128xf32>
    %14 = arith.addf %12, %13 : vector<16x128xf32>
    %cst_5 = arith.constant dense<0.000000e+00> : vector<16xf32>
    %15 = vector.multi_reduction <add>, %14, %cst_5 [1] : vector<16x128xf32> to vector<16xf32>
    %16 = vector.shape_cast %15 : vector<16xf32> to vector<16x1xf32>
    %cst_6 = arith.constant 1.280000e+02 : f32
    %17 = vector.broadcast %cst_6 : f32 to vector<16x1xf32>
    %18 = arith.divf %16, %17 : vector<16x1xf32>
    %19 = vector.broadcast %18 : vector<16x1xf32> to vector<16x128xf32>
    %20 = arith.subf %14, %19 : vector<16x128xf32>
    %21 = arith.mulf %20, %20 : vector<16x128xf32>
    %cst_7 = arith.constant dense<0.000000e+00> : vector<16xf32>
    %22 = vector.multi_reduction <add>, %21, %cst_7 [1] : vector<16x128xf32> to vector<16xf32>
    %23 = vector.shape_cast %22 : vector<16xf32> to vector<16x1xf32>
    %cst_8 = arith.constant 1.280000e+02 : f32
    %24 = vector.broadcast %cst_8 : f32 to vector<16x1xf32>
    %25 = arith.divf %23, %24 : vector<16x1xf32>
    %cst_9 = arith.constant 9.99999974E-6 : f32
    %26 = vector.broadcast %cst_9 : f32 to vector<16x1xf32>
    %27 = arith.addf %25, %26 : vector<16x1xf32>
    %28 = math.rsqrt %27 : vector<16x1xf32>
    %29 = vector.broadcast %28 : vector<16x1xf32> to vector<16x128xf32>
    %30 = arith.mulf %20, %29 : vector<16x128xf32>
    %31 = vector.broadcast %2 : vector<1x128xf32> to vector<16x128xf32>
    %32 = arith.mulf %30, %31 : vector<16x128xf32>
    %33 = vector.broadcast %3 : vector<1x128xf32> to vector<16x128xf32>
    %34 = arith.addf %32, %33 : vector<16x128xf32>
    %cst_10 = arith.constant 0.000000e+00 : f32
    %35 = vector.broadcast %cst_10 : f32 to vector<16x128xf32>
    %36 = arith.maximumf %34, %35 : vector<16x128xf32>
    %c0_11 = arith.constant 0 : index
    %c0_12 = arith.constant 0 : index
    %37 = vector.load %arg2[%c0_11, %c0_12] : memref<16x256xbf16, #tpu.memory_space<vmem>>, vector<16x256xbf16>
    %c0_13 = arith.constant 0 : index
    %c0_14 = arith.constant 0 : index
    %38 = vector.load %arg4[%c0_13, %c0_14] : memref<256x128xbf16, #tpu.memory_space<vmem>>, vector<256x128xbf16>
    %cst_15 = arith.constant dense<0.000000e+00> : vector<16x128xf32>
    %39 = tpu.matmul %37, %38, %cst_15 {dimension_numbers = #tpu.dot_dimension_numbers<[1], [0], [0], [1], [0, 0, 1, 1], [], []>} : vector<16x256xbf16>, vector<256x128xbf16>, vector<16x128xf32> -> vector<16x128xf32>
    %40 = vector.broadcast %4 : vector<1x128xf32> to vector<16x128xf32>
    %41 = arith.addf %39, %40 : vector<16x128xf32>
    %cst_16 = arith.constant dense<0.000000e+00> : vector<16xf32>
    %42 = vector.multi_reduction <add>, %41, %cst_16 [1] : vector<16x128xf32> to vector<16xf32>
    %43 = vector.shape_cast %42 : vector<16xf32> to vector<16x1xf32>
    %cst_17 = arith.constant 1.280000e+02 : f32
    %44 = vector.broadcast %cst_17 : f32 to vector<16x1xf32>
    %45 = arith.divf %43, %44 : vector<16x1xf32>
    %46 = vector.broadcast %45 : vector<16x1xf32> to vector<16x128xf32>
    %47 = arith.subf %41, %46 : vector<16x128xf32>
    %48 = arith.mulf %47, %47 : vector<16x128xf32>
    %cst_18 = arith.constant dense<0.000000e+00> : vector<16xf32>
    %49 = vector.multi_reduction <add>, %48, %cst_18 [1] : vector<16x128xf32> to vector<16xf32>
    %50 = vector.shape_cast %49 : vector<16xf32> to vector<16x1xf32>
    %cst_19 = arith.constant 1.280000e+02 : f32
    %51 = vector.broadcast %cst_19 : f32 to vector<16x1xf32>
    %52 = arith.divf %50, %51 : vector<16x1xf32>
    %cst_20 = arith.constant 9.99999974E-6 : f32
    %53 = vector.broadcast %cst_20 : f32 to vector<16x1xf32>
    %54 = arith.addf %52, %53 : vector<16x1xf32>
    %55 = math.rsqrt %54 : vector<16x1xf32>
    %56 = vector.broadcast %55 : vector<16x1xf32> to vector<16x128xf32>
    %57 = arith.mulf %47, %56 : vector<16x128xf32>
    %58 = vector.broadcast %5 : vector<1x128xf32> to vector<16x128xf32>
    %59 = arith.mulf %57, %58 : vector<16x128xf32>
    %60 = vector.broadcast %6 : vector<1x128xf32> to vector<16x128xf32>
    %61 = arith.addf %59, %60 : vector<16x128xf32>
    %cst_21 = arith.constant 0.000000e+00 : f32
    %62 = vector.broadcast %cst_21 : f32 to vector<16x128xf32>
    %63 = arith.maximumf %61, %62 : vector<16x128xf32>
    %64 = arith.truncf %36 : vector<16x128xf32> to vector<16x128xbf16>
    %c0_22 = arith.constant 0 : index
    %c0_23 = arith.constant 0 : index
    %65 = vector.load %arg5[%c0_22, %c0_23] : memref<128x128xbf16, #tpu.memory_space<vmem>>, vector<128x128xbf16>
    %cst_24 = arith.constant dense<0.000000e+00> : vector<16x128xf32>
    %66 = tpu.matmul %64, %65, %cst_24 {dimension_numbers = #tpu.dot_dimension_numbers<[1], [0], [0], [1], [0, 0, 1, 1], [], []>} : vector<16x128xbf16>, vector<128x128xbf16>, vector<16x128xf32> -> vector<16x128xf32>
    %67 = arith.truncf %63 : vector<16x128xf32> to vector<16x128xbf16>
    %c0_25 = arith.constant 0 : index
    %c0_26 = arith.constant 0 : index
    %68 = vector.load %arg6[%c0_25, %c0_26] : memref<128x128xbf16, #tpu.memory_space<vmem>>, vector<128x128xbf16>
    %cst_27 = arith.constant dense<0.000000e+00> : vector<16x128xf32>
    %69 = tpu.matmul %67, %68, %cst_27 {dimension_numbers = #tpu.dot_dimension_numbers<[1], [0], [0], [1], [0, 0, 1, 1], [], []>} : vector<16x128xbf16>, vector<128x128xbf16>, vector<16x128xf32> -> vector<16x128xf32>
    %70 = arith.addf %66, %69 : vector<16x128xf32>
    %71 = vector.broadcast %7 : vector<1x128xf32> to vector<16x128xf32>
    %72 = arith.addf %70, %71 : vector<16x128xf32>
    %cst_28 = arith.constant dense<0.000000e+00> : vector<16xf32>
    %73 = vector.multi_reduction <add>, %72, %cst_28 [1] : vector<16x128xf32> to vector<16xf32>
    %74 = vector.shape_cast %73 : vector<16xf32> to vector<16x1xf32>
    %cst_29 = arith.constant 1.280000e+02 : f32
    %75 = vector.broadcast %cst_29 : f32 to vector<16x1xf32>
    %76 = arith.divf %74, %75 : vector<16x1xf32>
    %77 = vector.broadcast %76 : vector<16x1xf32> to vector<16x128xf32>
    %78 = arith.subf %72, %77 : vector<16x128xf32>
    %79 = arith.mulf %78, %78 : vector<16x128xf32>
    %cst_30 = arith.constant dense<0.000000e+00> : vector<16xf32>
    %80 = vector.multi_reduction <add>, %79, %cst_30 [1] : vector<16x128xf32> to vector<16xf32>
    %81 = vector.shape_cast %80 : vector<16xf32> to vector<16x1xf32>
    %cst_31 = arith.constant 1.280000e+02 : f32
    %82 = vector.broadcast %cst_31 : f32 to vector<16x1xf32>
    %83 = arith.divf %81, %82 : vector<16x1xf32>
    %cst_32 = arith.constant 9.99999974E-6 : f32
    %84 = vector.broadcast %cst_32 : f32 to vector<16x1xf32>
    %85 = arith.addf %83, %84 : vector<16x1xf32>
    %86 = math.rsqrt %85 : vector<16x1xf32>
    %87 = vector.broadcast %86 : vector<16x1xf32> to vector<16x128xf32>
    %88 = arith.mulf %78, %87 : vector<16x128xf32>
    %89 = vector.broadcast %8 : vector<1x128xf32> to vector<16x128xf32>
    %90 = arith.mulf %88, %89 : vector<16x128xf32>
    %91 = vector.broadcast %9 : vector<1x128xf32> to vector<16x128xf32>
    %92 = arith.addf %90, %91 : vector<16x128xf32>
    %cst_33 = arith.constant 0.000000e+00 : f32
    %93 = vector.broadcast %cst_33 : f32 to vector<16x128xf32>
    %94 = arith.maximumf %92, %93 : vector<16x128xf32>
    %95 = arith.truncf %94 : vector<16x128xf32> to vector<16x128xbf16>
    %c0_34 = arith.constant 0 : index
    %c0_35 = arith.constant 0 : index
    %96 = vector.load %arg8[%c0_34, %c0_35] : memref<16x128xbf16, #tpu.memory_space<vmem>>, vector<16x128xbf16>
    tpu.vector_store %arg8[%c0_34, %c0_35], %95 {strides = array<i32>} : memref<16x128xbf16, #tpu.memory_space<vmem>>, vector<16x128xbf16>,
    return
  }
  func.func @transform_0(%arg0: i32) -> (i32, i32) {
    %c0_i32 = arith.constant 0 : i32
    %c0_i32_0 = arith.constant 0 : i32
    return %arg0, %c0_i32 : i32, i32
  }
  func.func @transform_1(%arg0: i32) -> (i32, i32) {
    %c0_i32 = arith.constant 0 : i32
    %c0_i32_0 = arith.constant 0 : i32
    return %arg0, %c0_i32 : i32, i32
  }
  func.func @transform_2(%arg0: i32) -> (i32, i32) {
    %c0_i32 = arith.constant 0 : i32
    %c0_i32_0 = arith.constant 0 : i32
    %c0_i32_1 = arith.constant 0 : i32
    return %c0_i32, %c0_i32_0 : i32, i32
  }
  func.func @transform_3(%arg0: i32) -> (i32, i32) {
    %c0_i32 = arith.constant 0 : i32
    %c0_i32_0 = arith.constant 0 : i32
    %c0_i32_1 = arith.constant 0 : i32
    return %c0_i32, %c0_i32_0 : i32, i32
  }
  func.func @transform_4(%arg0: i32) -> (i32, i32) {
    %c0_i32 = arith.constant 0 : i32
    %c0_i32_0 = arith.constant 0 : i32
    %c0_i32_1 = arith.constant 0 : i32
    return %c0_i32, %c0_i32_0 : i32, i32
  }
  func.func @transform_5(%arg0: i32) -> (i32, i32) {
    %c0_i32 = arith.constant 0 : i32
    %c0_i32_0 = arith.constant 0 : i32
    %c0_i32_1 = arith.constant 0 : i32
    return %c0_i32, %c0_i32_0 : i32, i32
  }
  func.func @transform_6(%arg0: i32) -> (i32, i32) {
    %c0_i32 = arith.constant 0 : i32
    %c0_i32_0 = arith.constant 0 : i32
    %c0_i32_1 = arith.constant 0 : i32
    return %c0_i32, %c0_i32_0 : i32, i32
  }
  func.func @transform_7(%arg0: i32) -> (i32, i32) {
    %c0_i32 = arith.constant 0 : i32
    %c0_i32_0 = arith.constant 0 : i32
    return %arg0, %c0_i32 : i32, i32
  }
}

</mosaic_0001>

<llo_original>
// kernel: tpu_custom_call.1
$region0: #{tpu_custom_call.1}
  #allocation0 [shape = 'u32[]', space=smem, size = 0x4, offset = 0x4, fixed_abs, tag = 'smem constant byte address 0x4 - core index']
  #allocation1 [shape = 'u32[144,128]{1,0:T(1,128)}', space=vmem, size = 0x12000, scoped, tag = 'internal scratch']
  %s0 = inlined_call_operand.hbm [shape: bf16[16,256], index: 0, kind: input, shape index: {}]
  %s1 = inlined_call_operand.hbm [shape: bf16[16,256], index: 1, kind: input, shape index: {}]
  %s2 = inlined_call_operand.hbm [shape: bf16[256,128], index: 2, kind: input, shape index: {}]
  %s3 = inlined_call_operand.hbm [shape: bf16[256,128], index: 3, kind: input, shape index: {}]
  %s4 = inlined_call_operand.hbm [shape: bf16[128,128], index: 4, kind: input, shape index: {}]
  %s5 = inlined_call_operand.hbm [shape: bf16[128,128], index: 5, kind: input, shape index: {}]
  %s6 = inlined_call_operand.vmem [shape: f32[16,128], index: 6, kind: input, shape index: {}]
  %s7 = inlined_call_operand.hbm [shape: bf16[16,128], index: 7, kind: output, shape index: {}]
  %s8 = sld [smem:[#allocation0]]
  $region62: #{tpu_custom_call.1} parent=0
    _
  %s10 = ssub.s32 1, %s8
  %s11 = scalar_select 0, %s10, %s8
  $region1: #{tpu_custom_call.1} parent=0
    #allocation2 [shape = 'u8[8192]{0}', space=vmem, size = 0x2000, scoped, tag = 'input window, operand 0, single buffered']
    #allocation3 [shape = 's32[1]{0}', space=sflag, size = 0x4, scoped, tag = 'scoped memory for tpu_custom_call.1']
    #allocation4 [shape = 's32[1]{0}', space=sflag, size = 0x4, scoped, tag = 'scoped memory for tpu_custom_call.1']
    #allocation5 [shape = 'u8[8192]{0}', space=vmem, size = 0x2000, scoped, tag = 'input window, operand 1, single buffered']
    #allocation6 [shape = 's32[1]{0}', space=sflag, size = 0x4, scoped, tag = 'scoped memory for tpu_custom_call.1']
    #allocation7 [shape = 'u8[65536]{0}', space=vmem, size = 0x10000, scoped, tag = 'input window, operand 2, single buffered']
    #allocation8 [shape = 'u8[65536]{0}', space=vmem, size = 0x10000, scoped, tag = 'input window, operand 3, single buffered']
    #allocation9 [shape = 's32[1]{0}', space=sflag, size = 0x4, scoped, tag = 'scoped memory for tpu_custom_call.1']
    #allocation10 [shape = 'u8[32768]{0}', space=vmem, size = 0x8000, scoped, tag = 'input window, operand 4, single buffered']
    #allocation11 [shape = 'u8[32768]{0}', space=vmem, size = 0x8000, scoped, tag = 'input window, operand 5, single buffered']
    #allocation12 [shape = 's32[1]{0}', space=sflag, size = 0x4, scoped, tag = 'scoped memory for tpu_custom_call.1']
    #allocation13 [shape = 'u8[4096]{0}', space=vmem, size = 0x1000, scoped, tag = 'output window, operand 0, single buffered']
    %12 = vsyncpa [#allocation3], 0
    %13 = vsyncpa [#allocation6], 0
    %14 = vsyncpa [#allocation9], 0
    %15 = vsyncpa [#allocation12], 0
    %16 = vsyncpa [#allocation4], 0
    // Predicated region
    $region2: #{tpu_custom_call.1} parent=1 // pred_check
      _
    $region3: #{tpu_custom_call.1} parent=1 // pred_check_branch
      %18 = sbr.rel (0) target = $region5
    $region4: #{tpu_custom_call.1} parent=1 // pred_region
      %s20 = ssub.s32 256, 256
      %21 = vsyncadd [#allocation3], %s20
      %s22 = sshll.u32 [#allocation2], 4
      %s23 = int_to_ptr.vmem [resolvable:$true] %s22
      %28 = dma.hbm_to_vmem [thread:$0]  %s0, 256, %s23, [#allocation3], 128, 128, 8
    $region5: #{tpu_custom_call.1} parent=1 // pred_fallthru
      _
    // Predicated region
    $region6: #{tpu_custom_call.1} parent=1 // pred_check
      _
    $region7: #{tpu_custom_call.1} parent=1 // pred_check_branch
      %30 = sbr.rel (0) target = $region9
    $region8: #{tpu_custom_call.1} parent=1 // pred_region
      %s32 = ssub.s32 256, 256
      %33 = vsyncadd [#allocation6], %s32
      %s34 = sshll.u32 [#allocation5], 4
      %s35 = int_to_ptr.vmem [resolvable:$true] %s34
      %40 = dma.hbm_to_vmem [thread:$0]  %s1, 256, %s35, [#allocation6], 128, 128, 8
    $region9: #{tpu_custom_call.1} parent=1 // pred_fallthru
      _
    // Predicated region
    $region10: #{tpu_custom_call.1} parent=1 // pred_check
      _
    $region11: #{tpu_custom_call.1} parent=1 // pred_check_branch
      %42 = sbr.rel (0) target = $region13
    $region12: #{tpu_custom_call.1} parent=1 // pred_region
      %s44 = ssub.s32 2048, 2048
      %45 = vsyncadd [#allocation6], %s44
      %s46 = sshll.u32 [#allocation7], 4
      %s47 = int_to_ptr.vmem [resolvable:$true] %s46
      %52 = dma.hbm_to_vmem [thread:$0]  %s2, 2048, %s47, [#allocation6], 64, 64, 4
    $region13: #{tpu_custom_call.1} parent=1 // pred_fallthru
      _
    // Predicated region
    $region14: #{tpu_custom_call.1} parent=1 // pred_check
      _
    $region15: #{tpu_custom_call.1} parent=1 // pred_check_branch
      %54 = sbr.rel (0) target = $region17
    $region16: #{tpu_custom_call.1} parent=1 // pred_region
      %s56 = ssub.s32 2048, 2048
      %57 = vsyncadd [#allocation9], %s56
      %s58 = sshll.u32 [#allocation8], 4
      %s59 = int_to_ptr.vmem [resolvable:$true] %s58
      %64 = dma.hbm_to_vmem [thread:$0]  %s3, 2048, %s59, [#allocation9], 64, 64, 4
    $region17: #{tpu_custom_call.1} parent=1 // pred_fallthru
      _
    // Predicated region
    $region18: #{tpu_custom_call.1} parent=1 // pred_check
      _
    $region19: #{tpu_custom_call.1} parent=1 // pred_check_branch
      %66 = sbr.rel (0) target = $region21
    $region20: #{tpu_custom_call.1} parent=1 // pred_region
      %s68 = ssub.s32 1024, 1024
      %69 = vsyncadd [#allocation9], %s68
      %s70 = sshll.u32 [#allocation10], 4
      %s71 = int_to_ptr.vmem [resolvable:$true] %s70
      %76 = dma.hbm_to_vmem [thread:$0]  %s4, 1024, %s71, [#allocation9], 64, 64, 4
    $region21: #{tpu_custom_call.1} parent=1 // pred_fallthru
      _
    // Predicated region
    $region22: #{tpu_custom_call.1} parent=1 // pred_check
      _
    $region23: #{tpu_custom_call.1} parent=1 // pred_check_branch
      %78 = sbr.rel (0) target = $region25
    $region24: #{tpu_custom_call.1} parent=1 // pred_region
      %s80 = ssub.s32 1024, 1024
      %81 = vsyncadd [#allocation12], %s80
      %s82 = sshll.u32 [#allocation11], 4
      %s83 = int_to_ptr.vmem [resolvable:$true] %s82
      %88 = dma.hbm_to_vmem [thread:$0]  %s5, 1024, %s83, [#allocation12], 64, 64, 4
    $region25: #{tpu_custom_call.1} parent=1 // pred_fallthru
      _
    // Predicated region
    $region26: #{tpu_custom_call.1} parent=1 // pred_check
      _
    $region27: #{tpu_custom_call.1} parent=1 // pred_check_branch
      %90 = sbr.rel (0) target = $region29
    $region28: #{tpu_custom_call.1} parent=1 // pred_region
      _
    $region29: #{tpu_custom_call.1} parent=1 // pred_fallthru
      _
    // Predicated region
    $region30: #{tpu_custom_call.1} parent=1 // pred_check
      _
    $region31: #{tpu_custom_call.1} parent=1 // pred_check_branch
      %92 = sbr.rel (0) target = $region33
    $region32: #{tpu_custom_call.1} parent=1 // pred_region
      %93 = dma.done [#allocation3], 256
    $region33: #{tpu_custom_call.1} parent=1 // pred_fallthru
      _
    // Predicated region
    $region34: #{tpu_custom_call.1} parent=1 // pred_check
      _
    $region35: #{tpu_custom_call.1} parent=1 // pred_check_branch
      %95 = sbr.rel (0) target = $region37
    $region36: #{tpu_custom_call.1} parent=1 // pred_region
      %96 = dma.done [#allocation6], 256
    $region37: #{tpu_custom_call.1} parent=1 // pred_fallthru
      _
    // Predicated region
    $region38: #{tpu_custom_call.1} parent=1 // pred_check
      _
    $region39: #{tpu_custom_call.1} parent=1 // pred_check_branch
      %98 = sbr.rel (0) target = $region41
    $region40: #{tpu_custom_call.1} parent=1 // pred_region
      %99 = dma.done [#allocation6], 2048
    $region41: #{tpu_custom_call.1} parent=1 // pred_fallthru
      _
    // Predicated region
    $region42: #{tpu_custom_call.1} parent=1 // pred_check
      _
    $region43: #{tpu_custom_call.1} parent=1 // pred_check_branch
      %101 = sbr.rel (0) target = $region45
    $region44: #{tpu_custom_call.1} parent=1 // pred_region
      %102 = dma.done [#allocation9], 2048
    $region45: #{tpu_custom_call.1} parent=1 // pred_fallthru
      _
    // Predicated region
    $region46: #{tpu_custom_call.1} parent=1 // pred_check
      _
    $region47: #{tpu_custom_call.1} parent=1 // pred_check_branch
      %104 = sbr.rel (0) target = $region49
    $region48: #{tpu_custom_call.1} parent=1 // pred_region
      %105 = dma.done [#allocation9], 1024
    $region49: #{tpu_custom_call.1} parent=1 // pred_fallthru
      _
    // Predicated region
    $region50: #{tpu_custom_call.1} parent=1 // pred_check
      _
    $region51: #{tpu_custom_call.1} parent=1 // pred_check_branch
      %107 = sbr.rel (0) target = $region53
    $region52: #{tpu_custom_call.1} parent=1 // pred_region
      %108 = dma.done [#allocation12], 1024
    $region53: #{tpu_custom_call.1} parent=1 // pred_fallthru
      _
    %v110 = vld [vmem:[%s6] sm:$0xff]
    %v111 = vld [vmem:[%s6 + $0x8] sm:$0xff]
    %v112 = vld [vmem:[#allocation2] sm:$0xff]
    %v113 = vld [vmem:[#allocation2 + $0x8] sm:$0xff]
    %v114 = vld [vmem:[#allocation7] sm:$0xf]
    %v115 = vld [vmem:[#allocation7 + $0x4] sm:$0xf]
    %v116 = vld [vmem:[#allocation7 + $0x8] sm:$0xf]
    %v117 = vld [vmem:[#allocation7 + $0xc] sm:$0xf]
    %v118 = vld [vmem:[#allocation7 + $0x10] sm:$0xf]
    %v119 = vld [vmem:[#allocation7 + $0x14] sm:$0xf]
    %v120 = vld [vmem:[#allocation7 + $0x18] sm:$0xf]
    %v121 = vld [vmem:[#allocation7 + $0x1c] sm:$0xf]
    %v122 = vld [vmem:[#allocation7 + $0x20] sm:$0xf]
    %v123 = vld [vmem:[#allocation7 + $0x24] sm:$0xf]
    %v124 = vld [vmem:[#allocation7 + $0x28] sm:$0xf]
    %v125 = vld [vmem:[#allocation7 + $0x2c] sm:$0xf]
    %v126 = vld [vmem:[#allocation7 + $0x30] sm:$0xf]
    %v127 = vld [vmem:[#allocation7 + $0x34] sm:$0xf]
    %v128 = vld [vmem:[#allocation7 + $0x38] sm:$0xf]
    %v129 = vld [vmem:[#allocation7 + $0x3c] sm:$0xf]
    %v130 = vld [vmem:[#allocation7 + $0x40] sm:$0xf]
    %v131 = vld [vmem:[#allocation7 + $0x44] sm:$0xf]
    %v132 = vld [vmem:[#allocation7 + $0x48] sm:$0xf]
    %v133 = vld [vmem:[#allocation7 + $0x4c] sm:$0xf]
    %v134 = vld [vmem:[#allocation7 + $0x50] sm:$0xf]
    %v135 = vld [vmem:[#allocation7 + $0x54] sm:$0xf]
    %v136 = vld [vmem:[#allocation7 + $0x58] sm:$0xf]
    %v137 = vld [vmem:[#allocation7 + $0x5c] sm:$0xf]
    %v138 = vld [vmem:[#allocation7 + $0x60] sm:$0xf]
    %v139 = vld [vmem:[#allocation7 + $0x64] sm:$0xf]
    %v140 = vld [vmem:[#allocation7 + $0x68] sm:$0xf]
    %v141 = vld [vmem:[#allocation7 + $0x6c] sm:$0xf]
    %v142 = vld [vmem:[#allocation7 + $0x70] sm:$0xf]
    %v143 = vld [vmem:[#allocation7 + $0x74] sm:$0xf]
    %v144 = vld [vmem:[#allocation7 + $0x78] sm:$0xf]
    %v145 = vld [vmem:[#allocation7 + $0x7c] sm:$0xf]
    %v146 = vlaneseq
    %v147 = vshrl.u32 %v146, 7
    %v148 = vsub.s32 0, %v147
    %v149 = vrot.slane %v110, %v148
    %v152 = vunpack.c.l.b16 %v112
    %v153 = vunpack.c.h.b16 %v112
    %v154 = vunpack.c.l.b16 %v113
    %v155 = vunpack.c.h.b16 %v113
    %v156 = vpack.c.b16 %v154, %v152
    %v157 = vpack.c.b16 %v155, %v153
    %v192 = vunpack.c.l.b16 %v114
    %v193 = vunpack.c.l.b16 %v115
    %v194 = vunpack.c.l.b16 %v116
    %v195 = vunpack.c.l.b16 %v117
    %v196 = vunpack.c.l.b16 %v118
    %v197 = vunpack.c.l.b16 %v119
    %v198 = vunpack.c.l.b16 %v120
    %v199 = vunpack.c.l.b16 %v121
    %v200 = vunpack.c.l.b16 %v122
    %v201 = vunpack.c.l.b16 %v123
    %v202 = vunpack.c.l.b16 %v124
    %v203 = vunpack.c.l.b16 %v125
    %v204 = vunpack.c.l.b16 %v126
    %v205 = vunpack.c.l.b16 %v127
    %v206 = vunpack.c.l.b16 %v128
    %v207 = vunpack.c.l.b16 %v129
    %v208 = vunpack.c.l.b16 %v130
    %v209 = vunpack.c.l.b16 %v131
    %v210 = vunpack.c.l.b16 %v132
    %v211 = vunpack.c.l.b16 %v133
    %v212 = vunpack.c.l.b16 %v134
    %v213 = vunpack.c.l.b16 %v135
    %v214 = vunpack.c.l.b16 %v136
    %v215 = vunpack.c.l.b16 %v137
    %v216 = vunpack.c.l.b16 %v138
    %v217 = vunpack.c.l.b16 %v139
    %v218 = vunpack.c.l.b16 %v140
    %v219 = vunpack.c.l.b16 %v141
    %v220 = vunpack.c.l.b16 %v142
    %v221 = vunpack.c.l.b16 %v143
    %v222 = vunpack.c.l.b16 %v144
    %v223 = vunpack.c.l.b16 %v145
    %v224 = vpack.c.b16 %v193, %v192
    %v225 = vpack.c.b16 %v195, %v194
    %v226 = vpack.c.b16 %v197, %v196
    %v227 = vpack.c.b16 %v199, %v198
    %v228 = vpack.c.b16 %v201, %v200
    %v229 = vpack.c.b16 %v203, %v202
    %v230 = vpack.c.b16 %v205, %v204
    %v231 = vpack.c.b16 %v207, %v206
    %v232 = vpack.c.b16 %v209, %v208
    %v233 = vpack.c.b16 %v211, %v210
    %v234 = vpack.c.b16 %v213, %v212
    %v235 = vpack.c.b16 %v215, %v214
    %v236 = vpack.c.b16 %v217, %v216
    %v237 = vpack.c.b16 %v219, %v218
    %v238 = vpack.c.b16 %v221, %v220
    %v239 = vpack.c.b16 %v223, %v222
    %256 = vmatprep.subr.bf16.mxu0 0
    %257 = vmatpush1.bf16.msra.mxu0 %v224
    %258 = vmatprep.subr.bf16.mxu0 0
    %259 = vmatpush1.bf16.msra.mxu0 %v225
    %260 = vmatprep.subr.bf16.mxu0 0
    %261 = vmatpush1.bf16.msra.mxu0 %v226
    %262 = vmatprep.subr.bf16.mxu0 0
    %263 = vmatpush1.bf16.msra.mxu0 %v227
    %264 = vmatprep.subr.bf16.mxu0 0
    %265 = vmatpush1.bf16.msra.mxu0 %v228
    %266 = vmatprep.subr.bf16.mxu0 0
    %267 = vmatpush1.bf16.msra.mxu0 %v229
    %268 = vmatprep.subr.bf16.mxu0 0
    %269 = vmatpush1.bf16.msra.mxu0 %v230
    %270 = vmatprep.subr.bf16.mxu0 0
    %271 = vmatpush1.bf16.msra.mxu0 %v231
    %272 = vmatprep.subr.bf16.mxu0 0
    %273 = vmatpush1.bf16.msra.mxu0 %v232
    %274 = vmatprep.subr.bf16.mxu0 0
    %275 = vmatpush1.bf16.msra.mxu0 %v233
    %276 = vmatprep.subr.bf16.mxu0 0
    %277 = vmatpush1.bf16.msra.mxu0 %v234
    %278 = vmatprep.subr.bf16.mxu0 0
    %279 = vmatpush1.bf16.msra.mxu0 %v235
    %280 = vmatprep.subr.bf16.mxu0 0
    %281 = vmatpush1.bf16.msra.mxu0 %v236
    %282 = vmatprep.subr.bf16.mxu0 0
    %283 = vmatpush1.bf16.msra.mxu0 %v237
    %284 = vmatprep.subr.bf16.mxu0 0
    %285 = vmatpush1.bf16.msra.mxu0 %v238
    %286 = vmatprep.subr.bf16.mxu0 0
    %287 = vmatpush1.bf16.msra.mxu0 %v239
    %288 = vmatprep.mubr.bf16.mxu0 %v157
    %289 = vmatmul.mubr.bf16.gmra.mrb[0].mxu0 %v156
    %v290 = vpop.f32.mrb[0].mxu0
    %v291 = vadd.f32 %v149, %v290
    %v292 = vpop.f32.mrb[0].mxu0
    %v293 = vpop.f32.mrb[0].mxu0
    %v294 = vadd.f32 %v149, %v293
    %v295 = vpop.f32.mrb[0].mxu0
    %296 = vdwg.mxu0
    %297 = vadd.xlane.f32.xlu0 %v291
    %v298 = vpop.xlane.xlu0 %297
    %299 = vadd.xlane.f32.xlu0 %v294
    %v300 = vpop.xlane.xlu0 %299
    %v301 = vrcp.pop 128.0
    %v302 = vmul.f32 %v298, %v301
    %v303 = vmul.f32 %v300, %v301
    %v304 = vsub.f32 %v291, %v302
    %v305 = vsub.f32 %v294, %v303
    %v306 = vmul.f32 %v304, %v304
    %v307 = vmul.f32 %v305, %v305
    %308 = vadd.xlane.f32.xlu0 %v306
    %v309 = vpop.xlane.xlu0 %308
    %310 = vadd.xlane.f32.xlu0 %v307
    %v311 = vpop.xlane.xlu0 %310
    %v312 = vmul.f32 %v309, %v301
    %v313 = vmul.f32 %v311, %v301
    %v314 = vadd.f32 %v312, 1e-05
    %v315 = vadd.f32 %v313, 1e-05
    %v316 = vrsqrt.pop %v314
    %v317 = vrsqrt.pop %v315
    %v318 = vmul.f32 %v304, %v316
    %v319 = vmul.f32 %v305, %v317
    %v320 = vlaneseq
    %v321 = vshrl.u32 %v320, 7
    %v322 = vsub.s32 1, %v321
    %v323 = vrot.slane %v110, %v322
    %v324 = vmul.f32 %v318, %v323
    %v325 = vmul.f32 %v319, %v323
    %v326 = vlaneseq
    %v327 = vshrl.u32 %v326, 7
    %v328 = vsub.s32 2, %v327
    %v329 = vrot.slane %v110, %v328
    %v330 = vadd.f32 %v324, %v329
    %v331 = vadd.f32 %v325, %v329
    %v332 = vmax.f32 %v330, 0.0
    %v333 = vmax.f32 %v331, 0.0
    %v334 = vld [vmem:[#allocation5] sm:$0xff]
    %v335 = vld [vmem:[#allocation5 + $0x8] sm:$0xff]
    %v336 = vld [vmem:[#allocation8] sm:$0xf]
    %v337 = vld [vmem:[#allocation8 + $0x4] sm:$0xf]
    %v338 = vld [vmem:[#allocation8 + $0x8] sm:$0xf]
    %v339 = vld [vmem:[#allocation8 + $0xc] sm:$0xf]
    %v340 = vld [vmem:[#allocation8 + $0x10] sm:$0xf]
    %v341 = vld [vmem:[#allocation8 + $0x14] sm:$0xf]
    %v342 = vld [vmem:[#allocation8 + $0x18] sm:$0xf]
    %v343 = vld [vmem:[#allocation8 + $0x1c] sm:$0xf]
    %v344 = vld [vmem:[#allocation8 + $0x20] sm:$0xf]
    %v345 = vld [vmem:[#allocation8 + $0x24] sm:$0xf]
    %v346 = vld [vmem:[#allocation8 + $0x28] sm:$0xf]
    %v347 = vld [vmem:[#allocation8 + $0x2c] sm:$0xf]
    %v348 = vld [vmem:[#allocation8 + $0x30] sm:$0xf]
    %v349 = vld [vmem:[#allocation8 + $0x34] sm:$0xf]
    %v350 = vld [vmem:[#allocation8 + $0x38] sm:$0xf]
    %v351 = vld [vmem:[#allocation8 + $0x3c] sm:$0xf]
    %v352 = vld [vmem:[#allocation8 + $0x40] sm:$0xf]
    %v353 = vld [vmem:[#allocation8 + $0x44] sm:$0xf]
    %v354 = vld [vmem:[#allocation8 + $0x48] sm:$0xf]
    %v355 = vld [vmem:[#allocation8 + $0x4c] sm:$0xf]
    %v356 = vld [vmem:[#allocation8 + $0x50] sm:$0xf]
    %v357 = vld [vmem:[#allocation8 + $0x54] sm:$0xf]
    %v358 = vld [vmem:[#allocation8 + $0x58] sm:$0xf]
    %v359 = vld [vmem:[#allocation8 + $0x5c] sm:$0xf]
    %v360 = vld [vmem:[#allocation8 + $0x60] sm:$0xf]
    %v361 = vld [vmem:[#allocation8 + $0x64] sm:$0xf]
    %v362 = vld [vmem:[#allocation8 + $0x68] sm:$0xf]
    %v363 = vld [vmem:[#allocation8 + $0x6c] sm:$0xf]
    %v364 = vld [vmem:[#allocation8 + $0x70] sm:$0xf]
    %v365 = vld [vmem:[#allocation8 + $0x74] sm:$0xf]
    %v366 = vld [vmem:[#allocation8 + $0x78] sm:$0xf]
    %v367 = vld [vmem:[#allocation8 + $0x7c] sm:$0xf]
    %v368 = vlaneseq
    %v369 = vshrl.u32 %v368, 7
    %v370 = vsub.s32 3, %v369
    %v371 = vrot.slane %v110, %v370
    %v374 = vunpack.c.l.b16 %v334
    %v375 = vunpack.c.h.b16 %v334
    %v376 = vunpack.c.l.b16 %v335
    %v377 = vunpack.c.h.b16 %v335
    %v378 = vpack.c.b16 %v376, %v374
    %v379 = vpack.c.b16 %v377, %v375
    %v414 = vunpack.c.l.b16 %v336
    %v415 = vunpack.c.l.b16 %v337
    %v416 = vunpack.c.l.b16 %v338
    %v417 = vunpack.c.l.b16 %v339
    %v418 = vunpack.c.l.b16 %v340
    %v419 = vunpack.c.l.b16 %v341
    %v420 = vunpack.c.l.b16 %v342
    %v421 = vunpack.c.l.b16 %v343
    %v422 = vunpack.c.l.b16 %v344
    %v423 = vunpack.c.l.b16 %v345
    %v424 = vunpack.c.l.b16 %v346
    %v425 = vunpack.c.l.b16 %v347
    %v426 = vunpack.c.l.b16 %v348
    %v427 = vunpack.c.l.b16 %v349
    %v428 = vunpack.c.l.b16 %v350
    %v429 = vunpack.c.l.b16 %v351
    %v430 = vunpack.c.l.b16 %v352
    %v431 = vunpack.c.l.b16 %v353
    %v432 = vunpack.c.l.b16 %v354
    %v433 = vunpack.c.l.b16 %v355
    %v434 = vunpack.c.l.b16 %v356
    %v435 = vunpack.c.l.b16 %v357
    %v436 = vunpack.c.l.b16 %v358
    %v437 = vunpack.c.l.b16 %v359
    %v438 = vunpack.c.l.b16 %v360
    %v439 = vunpack.c.l.b16 %v361
    %v440 = vunpack.c.l.b16 %v362
    %v441 = vunpack.c.l.b16 %v363
    %v442 = vunpack.c.l.b16 %v364
    %v443 = vunpack.c.l.b16 %v365
    %v444 = vunpack.c.l.b16 %v366
    %v445 = vunpack.c.l.b16 %v367
    %v446 = vpack.c.b16 %v415, %v414
    %v447 = vpack.c.b16 %v417, %v416
    %v448 = vpack.c.b16 %v419, %v418
    %v449 = vpack.c.b16 %v421, %v420
    %v450 = vpack.c.b16 %v423, %v422
    %v451 = vpack.c.b16 %v425, %v424
    %v452 = vpack.c.b16 %v427, %v426
    %v453 = vpack.c.b16 %v429, %v428
    %v454 = vpack.c.b16 %v431, %v430
    %v455 = vpack.c.b16 %v433, %v432
    %v456 = vpack.c.b16 %v435, %v434
    %v457 = vpack.c.b16 %v437, %v436
    %v458 = vpack.c.b16 %v439, %v438
    %v459 = vpack.c.b16 %v441, %v440
    %v460 = vpack.c.b16 %v443, %v442
    %v461 = vpack.c.b16 %v445, %v444
    %478 = vmatprep.subr.bf16.mxu0 0
    %479 = vmatpush1.bf16.msra.mxu0 %v446
    %480 = vmatprep.subr.bf16.mxu0 0
    %481 = vmatpush1.bf16.msra.mxu0 %v447
    %482 = vmatprep.subr.bf16.mxu0 0
    %483 = vmatpush1.bf16.msra.mxu0 %v448
    %484 = vmatprep.subr.bf16.mxu0 0
    %485 = vmatpush1.bf16.msra.mxu0 %v449
    %486 = vmatprep.subr.bf16.mxu0 0
    %487 = vmatpush1.bf16.msra.mxu0 %v450
    %488 = vmatprep.subr.bf16.mxu0 0
    %489 = vmatpush1.bf16.msra.mxu0 %v451
    %490 = vmatprep.subr.bf16.mxu0 0
    %491 = vmatpush1.bf16.msra.mxu0 %v452
    %492 = vmatprep.subr.bf16.mxu0 0
    %493 = vmatpush1.bf16.msra.mxu0 %v453
    %494 = vmatprep.subr.bf16.mxu0 0
    %495 = vmatpush1.bf16.msra.mxu0 %v454
    %496 = vmatprep.subr.bf16.mxu0 0
    %497 = vmatpush1.bf16.msra.mxu0 %v455
    %498 = vmatprep.subr.bf16.mxu0 0
    %499 = vmatpush1.bf16.msra.mxu0 %v456
    %500 = vmatprep.subr.bf16.mxu0 0
    %501 = vmatpush1.bf16.msra.mxu0 %v457
    %502 = vmatprep.subr.bf16.mxu0 0
    %503 = vmatpush1.bf16.msra.mxu0 %v458
    %504 = vmatprep.subr.bf16.mxu0 0
    %505 = vmatpush1.bf16.msra.mxu0 %v459
    %506 = vmatprep.subr.bf16.mxu0 0
    %507 = vmatpush1.bf16.msra.mxu0 %v460
    %508 = vmatprep.subr.bf16.mxu0 0
    %509 = vmatpush1.bf16.msra.mxu0 %v461
    %510 = vmatprep.mubr.bf16.mxu0 %v379
    %511 = vmatmul.mubr.bf16.gmra.mrb[0].mxu0 %v378
    %v512 = vpop.f32.mrb[0].mxu0
    %v513 = vadd.f32 %v371, %v512
    %v514 = vpop.f32.mrb[0].mxu0
    %v515 = vpop.f32.mrb[0].mxu0
    %v516 = vadd.f32 %v371, %v515
    %v517 = vpop.f32.mrb[0].mxu0
    %518 = vdwg.mxu0
    %519 = vadd.xlane.f32.xlu0 %v513
    %v520 = vpop.xlane.xlu0 %519
    %521 = vadd.xlane.f32.xlu0 %v516
    %v522 = vpop.xlane.xlu0 %521
    %v523 = vmul.f32 %v520, %v301
    %v524 = vmul.f32 %v522, %v301
    %v525 = vsub.f32 %v513, %v523
    %v526 = vsub.f32 %v516, %v524
    %v527 = vmul.f32 %v525, %v525
    %v528 = vmul.f32 %v526, %v526
    %529 = vadd.xlane.f32.xlu0 %v527
    %v530 = vpop.xlane.xlu0 %529
    %531 = vadd.xlane.f32.xlu0 %v528
    %v532 = vpop.xlane.xlu0 %531
    %v533 = vmul.f32 %v530, %v301
    %v534 = vmul.f32 %v532, %v301
    %v535 = vadd.f32 %v533, 1e-05
    %v536 = vadd.f32 %v534, 1e-05
    %v537 = vrsqrt.pop %v535
    %v538 = vrsqrt.pop %v536
    %v539 = vmul.f32 %v525, %v537
    %v540 = vmul.f32 %v526, %v538
    %v541 = vlaneseq
    %v542 = vshrl.u32 %v541, 7
    %v543 = vsub.s32 4, %v542
    %v544 = vrot.slane %v110, %v543
    %v545 = vmul.f32 %v539, %v544
    %v546 = vmul.f32 %v540, %v544
    %v547 = vlaneseq
    %v548 = vshrl.u32 %v547, 7
    %v549 = vsub.s32 5, %v548
    %v550 = vrot.slane %v110, %v549
    %v551 = vadd.f32 %v545, %v550
    %v552 = vadd.f32 %v546, %v550
    %v553 = vmax.f32 %v551, 0.0
    %v554 = vmax.f32 %v552, 0.0
    %v555 = vpack.c.bf16 %v333, %v332
    %v556 = vld [vmem:[#allocation10] sm:$0xf]
    %v557 = vld [vmem:[#allocation10 + $0x4] sm:$0xf]
    %v558 = vld [vmem:[#allocation10 + $0x8] sm:$0xf]
    %v559 = vld [vmem:[#allocation10 + $0xc] sm:$0xf]
    %v560 = vld [vmem:[#allocation10 + $0x10] sm:$0xf]
    %v561 = vld [vmem:[#allocation10 + $0x14] sm:$0xf]
    %v562 = vld [vmem:[#allocation10 + $0x18] sm:$0xf]
    %v563 = vld [vmem:[#allocation10 + $0x1c] sm:$0xf]
    %v564 = vld [vmem:[#allocation10 + $0x20] sm:$0xf]
    %v565 = vld [vmem:[#allocation10 + $0x24] sm:$0xf]
    %v566 = vld [vmem:[#allocation10 + $0x28] sm:$0xf]
    %v567 = vld [vmem:[#allocation10 + $0x2c] sm:$0xf]
    %v568 = vld [vmem:[#allocation10 + $0x30] sm:$0xf]
    %v569 = vld [vmem:[#allocation10 + $0x34] sm:$0xf]
    %v570 = vld [vmem:[#allocation10 + $0x38] sm:$0xf]
    %v571 = vld [vmem:[#allocation10 + $0x3c] sm:$0xf]
    %v572 = vpack.c.bf16 %v554, %v553
    %v573 = vld [vmem:[#allocation11] sm:$0xf]
    %v574 = vld [vmem:[#allocation11 + $0x4] sm:$0xf]
    %v575 = vld [vmem:[#allocation11 + $0x8] sm:$0xf]
    %v576 = vld [vmem:[#allocation11 + $0xc] sm:$0xf]
    %v577 = vld [vmem:[#allocation11 + $0x10] sm:$0xf]
    %v578 = vld [vmem:[#allocation11 + $0x14] sm:$0xf]
    %v579 = vld [vmem:[#allocation11 + $0x18] sm:$0xf]
    %v580 = vld [vmem:[#allocation11 + $0x1c] sm:$0xf]
    %v581 = vld [vmem:[#allocation11 + $0x20] sm:$0xf]
    %v582 = vld [vmem:[#allocation11 + $0x24] sm:$0xf]
    %v583 = vld [vmem:[#allocation11 + $0x28] sm:$0xf]
    %v584 = vld [vmem:[#allocation11 + $0x2c] sm:$0xf]
    %v585 = vld [vmem:[#allocation11 + $0x30] sm:$0xf]
    %v586 = vld [vmem:[#allocation11 + $0x34] sm:$0xf]
    %v587 = vld [vmem:[#allocation11 + $0x38] sm:$0xf]
    %v588 = vld [vmem:[#allocation11 + $0x3c] sm:$0xf]
    %v605 = vunpack.c.l.b16 %v573
    %v606 = vunpack.c.l.b16 %v574
    %v607 = vunpack.c.l.b16 %v575
    %v608 = vunpack.c.l.b16 %v576
    %v609 = vunpack.c.l.b16 %v577
    %v610 = vunpack.c.l.b16 %v578
    %v611 = vunpack.c.l.b16 %v579
    %v612 = vunpack.c.l.b16 %v580
    %v613 = vunpack.c.l.b16 %v581
    %v614 = vunpack.c.l.b16 %v582
    %v615 = vunpack.c.l.b16 %v583
    %v616 = vunpack.c.l.b16 %v584
    %v617 = vunpack.c.l.b16 %v585
    %v618 = vunpack.c.l.b16 %v586
    %v619 = vunpack.c.l.b16 %v587
    %v620 = vunpack.c.l.b16 %v588
    %v621 = vpack.c.b16 %v606, %v605
    %v622 = vpack.c.b16 %v608, %v607
    %v623 = vpack.c.b16 %v610, %v609
    %v624 = vpack.c.b16 %v612, %v611
    %v625 = vpack.c.b16 %v614, %v613
    %v626 = vpack.c.b16 %v616, %v615
    %v627 = vpack.c.b16 %v618, %v617
    %v628 = vpack.c.b16 %v620, %v619
    %637 = vmatprep.subr.bf16.mxu0 0
    %638 = vmatpush1.bf16.msra.mxu0 %v621
    %639 = vmatprep.subr.bf16.mxu0 0
    %640 = vmatpush1.bf16.msra.mxu0 %v622
    %641 = vmatprep.subr.bf16.mxu0 0
    %642 = vmatpush1.bf16.msra.mxu0 %v623
    %643 = vmatprep.subr.bf16.mxu0 0
    %644 = vmatpush1.bf16.msra.mxu0 %v624
    %645 = vmatprep.subr.bf16.mxu0 0
    %646 = vmatpush1.bf16.msra.mxu0 %v625
    %647 = vmatprep.subr.bf16.mxu0 0
    %648 = vmatpush1.bf16.msra.mxu0 %v626
    %649 = vmatprep.subr.bf16.mxu0 0
    %650 = vmatpush1.bf16.msra.mxu0 %v627
    %651 = vmatprep.subr.bf16.mxu0 0
    %652 = vmatpush1.bf16.msra.mxu0 %v628
    %653 = vmatprep.subr.bf16.mxu0 0
    %654 = vmatpush1.bf16.msra.mxu0 0
    %655 = vmatprep.subr.bf16.mxu0 0
    %656 = vmatpush1.bf16.msra.mxu0 0
    %657 = vmatprep.subr.bf16.mxu0 0
    %658 = vmatpush1.bf16.msra.mxu0 0
    %659 = vmatprep.subr.bf16.mxu0 0
    %660 = vmatpush1.bf16.msra.mxu0 0
    %661 = vmatprep.subr.bf16.mxu0 0
    %662 = vmatpush1.bf16.msra.mxu0 0
    %663 = vmatprep.subr.bf16.mxu0 0
    %664 = vmatpush1.bf16.msra.mxu0 0
    %665 = vmatprep.subr.bf16.mxu0 0
    %666 = vmatpush1.bf16.msra.mxu0 0
    %667 = vmatprep.subr.bf16.mxu0 0
    %668 = vmatpush1.bf16.msra.mxu0 0
    %669 = vmatprep.mubr.bf16.mxu0 0
    %670 = vmatmul.mubr.bf16.gmra.mrb[0].mxu0 %v572
    %v671 = vpop.f32.mrb[0].mxu0
    %v672 = vadd.f32 0.0, %v671
    %v673 = vpop.f32.mrb[0].mxu0
    %v674 = vpop.f32.mrb[0].mxu0
    %v675 = vadd.f32 0.0, %v674
    %v676 = vpop.f32.mrb[0].mxu0
    %677 = vdwg.mxu0
    %v694 = vunpack.c.l.b16 %v556
    %v695 = vunpack.c.l.b16 %v557
    %v696 = vunpack.c.l.b16 %v558
    %v697 = vunpack.c.l.b16 %v559
    %v698 = vunpack.c.l.b16 %v560
    %v699 = vunpack.c.l.b16 %v561
    %v700 = vunpack.c.l.b16 %v562
    %v701 = vunpack.c.l.b16 %v563
    %v702 = vunpack.c.l.b16 %v564
    %v703 = vunpack.c.l.b16 %v565
    %v704 = vunpack.c.l.b16 %v566
    %v705 = vunpack.c.l.b16 %v567
    %v706 = vunpack.c.l.b16 %v568
    %v707 = vunpack.c.l.b16 %v569
    %v708 = vunpack.c.l.b16 %v570
    %v709 = vunpack.c.l.b16 %v571
    %v710 = vpack.c.b16 %v695, %v694
    %v711 = vpack.c.b16 %v697, %v696
    %v712 = vpack.c.b16 %v699, %v698
    %v713 = vpack.c.b16 %v701, %v700
    %v714 = vpack.c.b16 %v703, %v702
    %v715 = vpack.c.b16 %v705, %v704
    %v716 = vpack.c.b16 %v707, %v706
    %v717 = vpack.c.b16 %v709, %v708
    %726 = vmatprep.subr.bf16.mxu0 0
    %727 = vmatpush1.bf16.msra.mxu0 %v710
    %728 = vmatprep.subr.bf16.mxu0 0
    %729 = vmatpush1.bf16.msra.mxu0 %v711
    %730 = vmatprep.subr.bf16.mxu0 0
    %731 = vmatpush1.bf16.msra.mxu0 %v712
    %732 = vmatprep.subr.bf16.mxu0 0
    %733 = vmatpush1.bf16.msra.mxu0 %v713
    %734 = vmatprep.subr.bf16.mxu0 0
    %735 = vmatpush1.bf16.msra.mxu0 %v714
    %736 = vmatprep.subr.bf16.mxu0 0
    %737 = vmatpush1.bf16.msra.mxu0 %v715
    %738 = vmatprep.subr.bf16.mxu0 0
    %739 = vmatpush1.bf16.msra.mxu0 %v716
    %740 = vmatprep.subr.bf16.mxu0 0
    %741 = vmatpush1.bf16.msra.mxu0 %v717
    %742 = vmatprep.subr.bf16.mxu0 0
    %743 = vmatpush1.bf16.msra.mxu0 0
    %744 = vmatprep.subr.bf16.mxu0 0
    %745 = vmatpush1.bf16.msra.mxu0 0
    %746 = vmatprep.subr.bf16.mxu0 0
    %747 = vmatpush1.bf16.msra.mxu0 0
    %748 = vmatprep.subr.bf16.mxu0 0
    %749 = vmatpush1.bf16.msra.mxu0 0
    %750 = vmatprep.subr.bf16.mxu0 0
    %751 = vmatpush1.bf16.msra.mxu0 0
    %752 = vmatprep.subr.bf16.mxu0 0
    %753 = vmatpush1.bf16.msra.mxu0 0
    %754 = vmatprep.subr.bf16.mxu0 0
    %755 = vmatpush1.bf16.msra.mxu0 0
    %756 = vmatprep.subr.bf16.mxu0 0
    %757 = vmatpush1.bf16.msra.mxu0 0
    %758 = vmatprep.mubr.bf16.mxu0 0
    %759 = vmatmul.mubr.bf16.gmra.mrb[0].mxu0 %v555
    %v760 = vpop.f32.mrb[0].mxu0
    %v761 = vadd.f32 %v672, %v760
    %v762 = vpop.f32.mrb[0].mxu0
    %v763 = vpop.f32.mrb[0].mxu0
    %v764 = vadd.f32 %v675, %v763
    %v765 = vpop.f32.mrb[0].mxu0
    %766 = vdwg.mxu0
    %v767 = vlaneseq
    %v768 = vshrl.u32 %v767, 7
    %v769 = vsub.s32 6, %v768
    %v770 = vrot.slane %v110, %v769
    %v771 = vadd.f32 %v761, %v770
    %v772 = vadd.f32 %v764, %v770
    %773 = vadd.xlane.f32.xlu0 %v771
    %v774 = vpop.xlane.xlu0 %773
    %775 = vadd.xlane.f32.xlu0 %v772
    %v776 = vpop.xlane.xlu0 %775
    %v777 = vmul.f32 %v774, %v301
    %v778 = vmul.f32 %v776, %v301
    %v779 = vsub.f32 %v771, %v777
    %v780 = vsub.f32 %v772, %v778
    %v781 = vmul.f32 %v779, %v779
    %v782 = vmul.f32 %v780, %v780
    %783 = vadd.xlane.f32.xlu0 %v781
    %v784 = vpop.xlane.xlu0 %783
    %785 = vadd.xlane.f32.xlu0 %v782
    %v786 = vpop.xlane.xlu0 %785
    %v787 = vmul.f32 %v784, %v301
    %v788 = vmul.f32 %v786, %v301
    %v789 = vadd.f32 %v787, 1e-05
    %v790 = vadd.f32 %v788, 1e-05
    %v791 = vrsqrt.pop %v789
    %v792 = vrsqrt.pop %v790
    %v793 = vmul.f32 %v779, %v791
    %v794 = vmul.f32 %v780, %v792
    %v795 = vlaneseq
    %v796 = vshrl.u32 %v795, 7
    %v797 = vsub.s32 7, %v796
    %v798 = vrot.slane %v110, %v797
    %v799 = vmul.f32 %v793, %v798
    %v800 = vmul.f32 %v794, %v798
    %v801 = vlaneseq
    %v802 = vshrl.u32 %v801, 7
    %v803 = vsub.s32 0, %v802
    %v804 = vrot.slane %v111, %v803
    %v805 = vadd.f32 %v799, %v804
    %v806 = vadd.f32 %v800, %v804
    %v807 = vmax.f32 %v805, 0.0
    %v808 = vmax.f32 %v806, 0.0
    %v809 = vpack.c.bf16 %v808, %v807
    %v811 = vunpack.c.l.b16 %v809
    %v812 = vunpack.c.h.b16 %v809
    %v813 = vpack.c.b16 %v811, %v811
    %v814 = vpack.c.b16 %v812, %v812
    %817 = vst [vmem:[#allocation13] sm:$0xf] %v813
    %818 = vst [vmem:[#allocation13 + $0x4] sm:$0xf] %v814
    // Predicated region
    $region54: #{tpu_custom_call.1} parent=1 // pred_check
      _
    $region55: #{tpu_custom_call.1} parent=1 // pred_check_branch
      %820 = sbr.rel (0) target = $region57
    $region56: #{tpu_custom_call.1} parent=1 // pred_region
      %s822 = ssub.s32 128, 128
      %823 = vsyncadd [#allocation4], %s822
      %s824 = sshll.u32 [#allocation13], 4
      %s825 = int_to_ptr.vmem [resolvable:$true] %s824
      %830 = dma.vmem_to_hbm [thread:$0]  %s825, 128, %s7, [#allocation4], 64, 64, 4
    $region57: #{tpu_custom_call.1} parent=1 // pred_fallthru
      _
    // Predicated region
    $region58: #{tpu_custom_call.1} parent=1 // pred_check
      _
    $region59: #{tpu_custom_call.1} parent=1 // pred_check_branch
      %832 = sbr.rel (0) target = $region61
    $region60: #{tpu_custom_call.1} parent=1 // pred_region
      %833 = dma.done [#allocation4], 128
    $region61: #{tpu_custom_call.1} parent=1 // pred_fallthru
      _
    %834 = vsyncpa [#allocation3], 1
    %835 = vsyncpa [#allocation6], 1
    %836 = vsyncpa [#allocation9], 1
    %837 = vsyncpa [#allocation12], 1
    %838 = vsyncpa [#allocation4], 1

</llo_original>
